<compile_context>
chip_gen: v6e
topology: v6e:2x2x1
jax: 0.10.0
libtpu: 0.0.40
codegen_flags: <defaults>
</compile_context>

<pallas_src>
import jax
import jax.numpy as jnp
from jax import lax
from jax.experimental import pallas as pl
from jax.experimental.pallas import tpu as pltpu


def _chip_traits():
    """(use_bf16_activations, two_tensorcores, big_vmem) from the device kind."""
    kind = ""
    try:
        kind = jax.devices()[0].device_kind.lower()
    except Exception:
        pass
    use_bf16_act = ("v6" in kind) or ("v7" in kind)   # bf16 VPU/EUP available
    two_cores = "v7" in kind                          # 2 TensorCores per chip
    big_vmem = any(g in kind for g in ("v2", "v3", "v4", "v5", "v6"))  # 128 MiB
    return use_bf16_act, two_cores, big_vmem


def _make_attention_pooling_kernel(n_valid, act_dtype):
    def kernel(x_ref, w1_ref, b1_ref, w2_ref, o_ref):
        # x_ref: (Bblk, Npad, F), w1_ref: (F, H) in act_dtype, b1_ref: (1, H),
        # w2_ref: (1, H)  (second Linear's weight as a broadcast row; its bias
        # b2 is dropped — softmax shift invariance), o_ref: (1, Bblk, F).
        Bblk, Npad, F = x_ref.shape
        H = w1_ref.shape[1]

        x = x_ref[...]                                        # (Bblk, Npad, F) f32
        xa = x.astype(act_dtype)

        # SiLU with a single EUP tanh: sigmoid(x) = 0.5 * (1 + tanh(x/2)).
        a = xa * (jnp.tanh(xa * 0.5) * 0.5 + 0.5)             # (Bblk, Npad, F)

        # First Linear on the MXU with fat M = Bblk*Npad rows. Npad is a
        # multiple of the sublane pack, so this reshape is a layout no-op.
        a2 = a.reshape(Bblk * Npad, F)
        h = jnp.dot(a2, w1_ref[...],
                    preferred_element_type=jnp.float32) + b1_ref[...]
        t = jnp.tanh(h.astype(act_dtype)).reshape(Bblk, Npad, H)

        # Second Linear (output width 1): broadcast-multiply + lane reduction
        # with keepdims — no lane relayout, no MXU involvement.
        s = jnp.sum(t * w2_ref[...], axis=-1, keepdims=True)  # (Bblk, Npad, 1) f32

        # Mask rows introduced by the sublane-pack padding of N.
        if Npad != n_valid:
            seq = lax.broadcasted_iota(jnp.int32, (1, Npad, 1), 1)
            s = jnp.where(seq < n_valid, s, -jnp.inf)

        # Softmax over the sequence (sublane) axis, kept unnormalized.
        m = jnp.max(s, axis=1, keepdims=True)                 # (Bblk, 1, 1)
        p = jnp.exp((s - m).astype(act_dtype)).astype(jnp.float32)

        # Layout-preserving VPU pooling: broadcast p over lanes, reduce sublanes.
        pooled = jnp.sum(p * x, axis=1)                       # (Bblk, F) f32
        l = jnp.sum(p, axis=1)                                # (Bblk, 1) f32

        # Exact normalization: the VPU divide is off the EUP-bound critical path.
        o_ref[0] = (pooled / l).astype(o_ref.dtype)

    return kernel


def attention_pooling(x, w1, b1, w2, b2=None):
    """x: (B, N, F). w1: (F, H), b1: (H,), w2: (H, 1), b2: (1,) (unused).

    b2 is accepted for API parity with the PyTorch module but is mathematically
    a no-op (softmax over the sequence is shift-invariant).
    """
    del b2
    B, N, F = x.shape
    H = w1.shape[1]

    use_bf16_act, two_cores, big_vmem = _chip_traits()
    act_dtype = jnp.bfloat16 if use_bf16_act else jnp.float32

    # --- pad N to the sublane pack so the in-kernel fat-M reshape is free ---
    pack = 16 if act_dtype == jnp.bfloat16 else 8
    Npad = ((N + pack - 1) // pack) * pack
    if Npad != N:
        x = jnp.pad(x, ((0, 0), (0, Npad - N), (0, 0)))

    # --- generation-aware batch-block sizing ---
    itemsize = jnp.dtype(x.dtype).itemsize
    act_size = jnp.dtype(act_dtype).itemsize
    target_block_bytes = (12 << 20) if big_vmem else (4 << 20)
    # Resident bytes per batch element per grid step: x block (double buffered)
    # + SiLU slab + first-Linear pre/post activations + small score vectors.
    per_batch = Npad * (F * (2 * itemsize + act_size) + H * (4 + act_size) + 16)
    bblk = max(1, min(B, target_block_bytes // max(per_batch, 1)))
    if two_cores and B >= 2:
        # Keep >= 2 parallel grid steps so both v7x TensorCores stay busy.
        bblk = min(bblk, pl.cdiv(B, 2))
    num_blocks = pl.cdiv(B, bblk)
    Bp = num_blocks * bblk
    if Bp != B:
        x = jnp.pad(x, ((0, Bp - B), (0, 0), (0, 0)))
    # TODO(synk): if Npad*F per batch element ever exceeds the block budget,
    # tile the N axis with an online-softmax accumulator instead of shrinking bblk.

    # Recompute the scoped-VMEM limit from the block that was actually chosen.
    vmem_ceiling = (96 << 20) if big_vmem else (48 << 20)
    vmem_limit = int(min(vmem_ceiling, max(32 << 20, 2 * bblk * per_batch + (4 << 20))))

    b1_2d = b1.reshape(1, H)
    w2_row = w2.reshape(1, H).astype(jnp.float32)   # (H, 1) column -> (1, H) row
    w1_in = w1.astype(act_dtype)                    # bf16 MXU operand on v6e/v7x

    # TODO(synk): pad F/H to multiples of 128 in the wrapper for lane-dense
    # MXU use and unmasked output stores when production dims are not aligned.
    # TODO(synk): on v5e, stream x as bf16 (upcast in-kernel) and/or set
    # pipeline_mode=pl.Buffered(3) on the x spec — it is near memory-bound there.

    kernel = _make_attention_pooling_kernel(N, act_dtype)

    out3 = pl.pallas_call(
        kernel,
        out_shape=jax.ShapeDtypeStruct((num_blocks, bblk, F), x.dtype),
        grid_spec=pltpu.PrefetchScalarGridSpec(
            num_scalar_prefetch=0,
            grid=(num_blocks,),
            in_specs=[
                pl.BlockSpec((bblk, Npad, F), lambda b: (b, 0, 0)),
                pl.BlockSpec((F, H), lambda b: (0, 0)),
                pl.BlockSpec((1, H), lambda b: (0, 0)),
                pl.BlockSpec((1, H), lambda b: (0, 0)),
            ],
            out_specs=pl.BlockSpec((1, bblk, F), lambda b: (b, 0, 0)),
        ),
        compiler_params=pltpu.CompilerParams(
            dimension_semantics=("parallel",),
            vmem_limit_bytes=vmem_limit,
        ),
    )(x, w1_in, b1_2d, w2_row)

    return out3.reshape(Bp, F)[:B]


def _reference(x, w1, b1, w2, b2):
    # Full PyTorch-module semantics, including b2.
    a = x * jax.nn.sigmoid(x)
    h = jnp.tanh(a @ w1 + b1)
    s = h @ w2 + b2                          # (B, N, 1)
    w = jax.nn.softmax(s, axis=1)
    return jnp.sum(w * x, axis=1)


if __name__ == "__main__":
    B, N, F, H = 2, 8, 32, 32

    key = jax.random.PRNGKey(0)
    kx, k1, k2, k3, k4 = jax.random.split(key, 5)

    x = jax.random.normal(kx, (B, N, F), dtype=jnp.float32)

    # PyTorch Linear stores (out, in); we keep y = x @ W.T + b by building
    # W.T directly as (in, out).
    w1 = jax.random.uniform(k1, (F, H), jnp.float32, -1.0, 1.0) / jnp.sqrt(F)
    b1 = jax.random.uniform(k2, (H,), jnp.float32, -1.0, 1.0) / jnp.sqrt(F)
    w2 = jax.random.uniform(k3, (H, 1), jnp.float32, -1.0, 1.0) / jnp.sqrt(H)
    b2 = jax.random.uniform(k4, (1,), jnp.float32, -1.0, 1.0) / jnp.sqrt(H)

    out = jax.block_until_ready(attention_pooling(x, w1, b1, w2, b2))
    ref = _reference(x, w1, b1, w2, b2)

    use_bf16_act, _, _ = _chip_traits()
    # bf16 transcendentals (v6e/v7x path) carry ~0.4% relative error per stage;
    # the pure-f32 path (v5e/unknown) is exact up to f32 rounding.
    tol = 3e-2 if use_bf16_act else 2e-3

    assert out.shape == (B, F)
    assert jnp.allclose(out, ref, atol=tol, rtol=tol), float(jnp.max(jnp.abs(out - ref)))

    print("KERNEL_OK")
</pallas_src>

<mosaic_0001>
module attributes {stable_mosaic.version = 11 : i64} {
  func.func @kernel(%arg0: i32, %arg1: memref<2x8x32xf32, #tpu.memory_space<vmem>>, %arg2: memref<32x32xf32, #tpu.memory_space<vmem>>, %arg3: memref<1x32xf32, #tpu.memory_space<vmem>>, %arg4: memref<1x32xf32, #tpu.memory_space<vmem>>, %arg5: memref<1x2x32xf32, #tpu.memory_space<vmem>>) attributes {dimension_semantics = [#tpu.dimension_semantics<parallel>], iteration_bounds = array<i64: 1>, scalar_prefetch = 0 : i64, scratch_operands = 0 : i64, tpu.core_type = #tpu.core_type<tc>, window_params = [{transform_indices = @transform_0, window_bounds = array<i64: 2, 8, 32>}, {pipeline_mode = #tpu.pipeline_mode<synchronous>, transform_indices = @transform_1, window_bounds = array<i64: 32, 32>}, {pipeline_mode = #tpu.pipeline_mode<synchronous>, transform_indices = @transform_2, window_bounds = array<i64: 1, 32>}, {pipeline_mode = #tpu.pipeline_mode<synchronous>, transform_indices = @transform_3, window_bounds = array<i64: 1, 32>}, {transform_indices = @transform_4, window_bounds = array<i64: 1, 2, 32>}]} {
    %c0 = arith.constant 0 : index
    %c0_0 = arith.constant 0 : index
    %c0_1 = arith.constant 0 : index
    %0 = vector.load %arg1[%c0, %c0_0, %c0_1] : memref<2x8x32xf32, #tpu.memory_space<vmem>>, vector<2x8x32xf32>
    %cst = arith.constant 5.000000e-01 : f32
    %1 = vector.broadcast %cst : f32 to vector<2x8x32xf32>
    %2 = arith.mulf %0, %1 : vector<2x8x32xf32>
    %3 = math.tanh %2 : vector<2x8x32xf32>
    %cst_2 = arith.constant 5.000000e-01 : f32
    %4 = vector.broadcast %cst_2 : f32 to vector<2x8x32xf32>
    %5 = arith.mulf %3, %4 : vector<2x8x32xf32>
    %cst_3 = arith.constant 5.000000e-01 : f32
    %6 = vector.broadcast %cst_3 : f32 to vector<2x8x32xf32>
    %7 = arith.addf %5, %6 : vector<2x8x32xf32>
    %8 = arith.mulf %0, %7 : vector<2x8x32xf32>
    %9 = vector.shape_cast %8 : vector<2x8x32xf32> to vector<16x32xf32>
    %c0_4 = arith.constant 0 : index
    %c0_5 = arith.constant 0 : index
    %10 = vector.load %arg2[%c0_4, %c0_5] : memref<32x32xf32, #tpu.memory_space<vmem>>, vector<32x32xf32>
    %cst_6 = arith.constant dense<0.000000e+00> : vector<16x32xf32>
    %11 = tpu.matmul %9, %10, %cst_6 {dimension_numbers = #tpu.dot_dimension_numbers<[1], [0], [0], [1], [0, 0, 1, 1], [], []>} : vector<16x32xf32>, vector<32x32xf32>, vector<16x32xf32> -> vector<16x32xf32>
    %c0_7 = arith.constant 0 : index
    %c0_8 = arith.constant 0 : index
    %12 = vector.load %arg3[%c0_7, %c0_8] : memref<1x32xf32, #tpu.memory_space<vmem>>, vector<1x32xf32>
    %13 = vector.broadcast %12 : vector<1x32xf32> to vector<16x32xf32>
    %14 = arith.addf %11, %13 : vector<16x32xf32>
    %15 = math.tanh %14 : vector<16x32xf32>
    %16 = vector.shape_cast %15 : vector<16x32xf32> to vector<2x8x32xf32>
    %c0_9 = arith.constant 0 : index
    %c0_10 = arith.constant 0 : index
    %17 = vector.load %arg4[%c0_9, %c0_10] : memref<1x32xf32, #tpu.memory_space<vmem>>, vector<1x32xf32>
    %18 = vector.shape_cast %17 : vector<1x32xf32> to vector<1x1x32xf32>
    %19 = vector.broadcast %18 : vector<1x1x32xf32> to vector<2x8x32xf32>
    %20 = arith.mulf %16, %19 : vector<2x8x32xf32>
    %cst_11 = arith.constant dense<0.000000e+00> : vector<2x8xf32>
    %21 = vector.multi_reduction <add>, %20, %cst_11 [2] : vector<2x8x32xf32> to vector<2x8xf32>
    %22 = vector.shape_cast %21 : vector<2x8xf32> to vector<2x8x1xf32>
    %cst_12 = arith.constant dense<0xFF800000> : vector<2x1xf32>
    %23 = vector.multi_reduction <maximumf>, %22, %cst_12 [1] : vector<2x8x1xf32> to vector<2x1xf32>
    %24 = vector.shape_cast %23 : vector<2x1xf32> to vector<2x1x1xf32>
    %25 = vector.broadcast %24 : vector<2x1x1xf32> to vector<2x8x1xf32>
    %26 = arith.subf %22, %25 : vector<2x8x1xf32>
    %27 = math.exp %26 : vector<2x8x1xf32>
    %28 = vector.broadcast %27 : vector<2x8x1xf32> to vector<2x8x32xf32>
    %29 = arith.mulf %28, %0 : vector<2x8x32xf32>
    %cst_13 = arith.constant dense<0.000000e+00> : vector<2x32xf32>
    %30 = vector.multi_reduction <add>, %29, %cst_13 [1] : vector<2x8x32xf32> to vector<2x32xf32>
    %cst_14 = arith.constant dense<0.000000e+00> : vector<2x1xf32>
    %31 = vector.multi_reduction <add>, %27, %cst_14 [1] : vector<2x8x1xf32> to vector<2x1xf32>
    %32 = vector.broadcast %31 : vector<2x1xf32> to vector<2x32xf32>
    %33 = arith.divf %30, %32 : vector<2x32xf32>
    %c0_15 = arith.constant 0 : index
    %c0_16 = arith.constant 0 : index
    %c0_17 = arith.constant 0 : index
    %34 = vector.load %arg5[%c0_15, %c0_16, %c0_17] : memref<1x2x32xf32, #tpu.memory_space<vmem>>, vector<1x2x32xf32>
    %35 = vector.shape_cast %34 : vector<1x2x32xf32> to vector<2x32xf32>
    %36 = vector.shape_cast %33 : vector<2x32xf32> to vector<1x2x32xf32>
    tpu.vector_store %arg5[%c0_15, %c0_16, %c0_17], %36 {strides = array<i32>} : memref<1x2x32xf32, #tpu.memory_space<vmem>>, vector<1x2x32xf32>,
    return
  }
  func.func @transform_0(%arg0: i32) -> (i32, i32, i32) {
    %c0_i32 = arith.constant 0 : i32
    %c0_i32_0 = arith.constant 0 : i32
    %c0_i32_1 = arith.constant 0 : i32
    return %arg0, %c0_i32, %c0_i32_0 : i32, i32, i32
  }
  func.func @transform_1(%arg0: i32) -> (i32, i32) {
    %c0_i32 = arith.constant 0 : i32
    %c0_i32_0 = arith.constant 0 : i32
    %c0_i32_1 = arith.constant 0 : i32
    return %c0_i32, %c0_i32_0 : i32, i32
  }
  func.func @transform_2(%arg0: i32) -> (i32, i32) {
    %c0_i32 = arith.constant 0 : i32
    %c0_i32_0 = arith.constant 0 : i32
    %c0_i32_1 = arith.constant 0 : i32
    return %c0_i32, %c0_i32_0 : i32, i32
  }
  func.func @transform_3(%arg0: i32) -> (i32, i32) {
    %c0_i32 = arith.constant 0 : i32
    %c0_i32_0 = arith.constant 0 : i32
    %c0_i32_1 = arith.constant 0 : i32
    return %c0_i32, %c0_i32_0 : i32, i32
  }
  func.func @transform_4(%arg0: i32) -> (i32, i32, i32) {
    %c0_i32 = arith.constant 0 : i32
    %c0_i32_0 = arith.constant 0 : i32
    %c0_i32_1 = arith.constant 0 : i32
    return %arg0, %c0_i32, %c0_i32_0 : i32, i32, i32
  }
}

</mosaic_0001>

<llo_original>
// kernel: tpu_custom_call.1
$region0: #{tpu_custom_call.1}
  #allocation0 [shape = 'u32[]', space=smem, size = 0x4, offset = 0x4, fixed_abs, tag = 'smem constant byte address 0x4 - core index']
  #allocation1 [shape = 'u32[144,128]{1,0:T(1,128)}', space=vmem, size = 0x12000, scoped, tag = 'internal scratch']
  %s0 = inlined_call_operand.hbm [shape: f32[2,8,32], index: 0, kind: input, shape index: {}]
  %s1 = inlined_call_operand.hbm [shape: f32[32,32], index: 1, kind: input, shape index: {}]
  %s2 = inlined_call_operand.vmem [shape: f32[1,32], index: 2, kind: input, shape index: {}]
  %s3 = inlined_call_operand.vmem [shape: f32[1,32], index: 3, kind: input, shape index: {}]
  %s4 = inlined_call_operand.hbm [shape: f32[1,2,32], index: 4, kind: output, shape index: {}]
  %s5 = sld [smem:[#allocation0]]
  $region34: #{tpu_custom_call.1} parent=0
    _
  %s7 = ssub.s32 1, %s5
  %s8 = scalar_select 0, %s7, %s5
  $region1: #{tpu_custom_call.1} parent=0
    #allocation2 [shape = 'u8[8192]{0}', space=vmem, size = 0x2000, scoped, tag = 'input window, operand 0, single buffered']
    #allocation3 [shape = 's32[1]{0}', space=sflag, size = 0x4, scoped, tag = 'scoped memory for tpu_custom_call.1']
    #allocation4 [shape = 's32[1]{0}', space=sflag, size = 0x4, scoped, tag = 'scoped memory for tpu_custom_call.1']
    #allocation5 [shape = 'u8[16384]{0}', space=vmem, size = 0x4000, scoped, tag = 'input window, operand 1, single buffered']
    #allocation6 [shape = 's32[1]{0}', space=sflag, size = 0x4, scoped, tag = 'scoped memory for tpu_custom_call.1']
    #allocation7 [shape = 'u8[1024]{0}', space=vmem, size = 0x400, scoped, tag = 'output window, operand 0, single buffered']
    %9 = vsyncpa [#allocation3], 0
    %10 = vsyncpa [#allocation6], 0
    %11 = vsyncpa [#allocation4], 0
    // Predicated region
    $region2: #{tpu_custom_call.1} parent=1 // pred_check
      _
    $region3: #{tpu_custom_call.1} parent=1 // pred_check_branch
      %13 = sbr.rel (0) target = $region5
    $region4: #{tpu_custom_call.1} parent=1 // pred_region
      %s15 = ssub.s32 256, 256
      %16 = vsyncadd [#allocation3], %s15
      %s17 = sshll.u32 [#allocation2], 4
      %s18 = int_to_ptr.vmem [resolvable:$true] %s17
      %23 = dma.hbm_to_vmem [thread:$0]  %s0, 256, %s18, [#allocation3], 128, 128, 8
    $region5: #{tpu_custom_call.1} parent=1 // pred_fallthru
      _
    // Predicated region
    $region6: #{tpu_custom_call.1} parent=1 // pred_check
      _
    $region7: #{tpu_custom_call.1} parent=1 // pred_check_branch
      %25 = sbr.rel (0) target = $region9
    $region8: #{tpu_custom_call.1} parent=1 // pred_region
      %s27 = ssub.s32 512, 512
      %28 = vsyncadd [#allocation6], %s27
      %s29 = sshll.u32 [#allocation5], 4
      %s30 = int_to_ptr.vmem [resolvable:$true] %s29
      %35 = dma.hbm_to_vmem [thread:$0]  %s1, 512, %s30, [#allocation6], 128, 128, 8
    $region9: #{tpu_custom_call.1} parent=1 // pred_fallthru
      _
    // Predicated region
    $region10: #{tpu_custom_call.1} parent=1 // pred_check
      _
    $region11: #{tpu_custom_call.1} parent=1 // pred_check_branch
      %37 = sbr.rel (0) target = $region13
    $region12: #{tpu_custom_call.1} parent=1 // pred_region
      _
    $region13: #{tpu_custom_call.1} parent=1 // pred_fallthru
      _
    // Predicated region
    $region14: #{tpu_custom_call.1} parent=1 // pred_check
      _
    $region15: #{tpu_custom_call.1} parent=1 // pred_check_branch
      %39 = sbr.rel (0) target = $region17
    $region16: #{tpu_custom_call.1} parent=1 // pred_region
      _
    $region17: #{tpu_custom_call.1} parent=1 // pred_fallthru
      _
    // Predicated region
    $region18: #{tpu_custom_call.1} parent=1 // pred_check
      _
    $region19: #{tpu_custom_call.1} parent=1 // pred_check_branch
      %41 = sbr.rel (0) target = $region21
    $region20: #{tpu_custom_call.1} parent=1 // pred_region
      %42 = dma.done [#allocation3], 256
    $region21: #{tpu_custom_call.1} parent=1 // pred_fallthru
      _
    // Predicated region
    $region22: #{tpu_custom_call.1} parent=1 // pred_check
      _
    $region23: #{tpu_custom_call.1} parent=1 // pred_check_branch
      %44 = sbr.rel (0) target = $region25
    $region24: #{tpu_custom_call.1} parent=1 // pred_region
      %45 = dma.done [#allocation6], 512
    $region25: #{tpu_custom_call.1} parent=1 // pred_fallthru
      _
    %v46 = vld [vmem:[#allocation2] sm:$0xff]
    %v47 = vld [vmem:[#allocation2 + $0x8] sm:$0xff]
    %v48 = vmul.f32 %v46, 0.5
    %v49 = vmul.f32 %v47, 0.5
    %v50 = vtanh.pop %v48
    %v51 = vtanh.pop %v49
    %v52 = vmul.f32 %v50, 0.5
    %v53 = vmul.f32 %v51, 0.5
    %v54 = vadd.f32 %v52, 0.5
    %v55 = vadd.f32 %v53, 0.5
    %v56 = vmul.f32 %v46, %v54
    %v57 = vmul.f32 %v47, %v55
    %v58 = vld [vmem:[#allocation5] sm:$0xff]
    %v59 = vld [vmem:[#allocation5 + $0x8] sm:$0xff]
    %v60 = vld [vmem:[#allocation5 + $0x10] sm:$0xff]
    %v61 = vld [vmem:[#allocation5 + $0x18] sm:$0xff]
    %v62 = vld [vmem:[%s2] sm:$0x1]
    %v64 = vlaneseq
    %v65 = vshrl.u32 %v64, 7
    %v66 = vsub.s32 0, %v65
    %v67 = vrot.slane %v62, %v66
    %vm69 = vcmask 261120
    %v71 = vsel %vm69, %v56, 0
    %v74 = vsel %vm69, %v57, 0
    %76 = vmatprep.subr.mxu0 0.0
    %77 = vmatpush1.msra.mxu0 0.0
    %78 = vmatprep.subr.mxu0 0.0
    %79 = vmatpush1.msra.mxu0 0.0
    %80 = vmatprep.subr.mxu0 0.0
    %81 = vmatpush1.msra.mxu0 0.0
    %82 = vmatprep.subr.mxu0 0.0
    %83 = vmatpush1.msra.mxu0 0.0
    %84 = vmatprep.subr.mxu0 0.0
    %85 = vmatpush1.msra.mxu0 0.0
    %86 = vmatprep.subr.mxu0 0.0
    %87 = vmatpush1.msra.mxu0 0.0
    %88 = vmatprep.subr.mxu0 0.0
    %89 = vmatpush1.msra.mxu0 0.0
    %90 = vmatprep.subr.mxu0 0.0
    %91 = vmatpush1.msra.mxu0 0.0
    %92 = vmatprep.subr.mxu0 0.0
    %93 = vmatpush1.msra.mxu0 0.0
    %94 = vmatprep.subr.mxu0 0.0
    %95 = vmatpush1.msra.mxu0 0.0
    %96 = vmatprep.subr.mxu0 0.0
    %97 = vmatpush1.msra.mxu0 0.0
    %98 = vmatprep.subr.mxu0 0.0
    %99 = vmatpush1.msra.mxu0 0.0
    %100 = vmatprep.subr.mxu0 0.0
    %101 = vmatpush1.msra.mxu0 %v61
    %102 = vmatprep.subr.mxu0 0.0
    %103 = vmatpush1.msra.mxu0 %v60
    %104 = vmatprep.subr.mxu0 0.0
    %105 = vmatpush1.msra.mxu0 %v59
    %106 = vmatprep.subr.mxu0 0.0
    %107 = vmatpush1.msra.mxu0 %v58
    %108 = vmatprep.subr.mxu0 0.0
    %109 = vmatpush2.msra.mxu0 0.0
    %110 = vmatprep.subr.mxu0 0.0
    %111 = vmatpush2.msra.mxu0 0.0
    %112 = vmatprep.subr.mxu0 0.0
    %113 = vmatpush2.msra.mxu0 0.0
    %114 = vmatprep.subr.mxu0 0.0
    %115 = vmatpush2.msra.mxu0 0.0
    %116 = vmatprep.subr.mxu0 0.0
    %117 = vmatpush2.msra.mxu0 0.0
    %118 = vmatprep.subr.mxu0 0.0
    %119 = vmatpush2.msra.mxu0 0.0
    %120 = vmatprep.subr.mxu0 0.0
    %121 = vmatpush2.msra.mxu0 0.0
    %122 = vmatprep.subr.mxu0 0.0
    %123 = vmatpush2.msra.mxu0 0.0
    %124 = vmatprep.subr.mxu0 0.0
    %125 = vmatpush2.msra.mxu0 0.0
    %126 = vmatprep.subr.mxu0 0.0
    %127 = vmatpush2.msra.mxu0 0.0
    %128 = vmatprep.subr.mxu0 0.0
    %129 = vmatpush2.msra.mxu0 0.0
    %130 = vmatprep.subr.mxu0 0.0
    %131 = vmatpush2.msra.mxu0 0.0
    %132 = vmatprep.subr.mxu0 0.0
    %133 = vmatpush2.msra.mxu0 0.0
    %134 = vmatprep.subr.mxu0 0.0
    %135 = vmatpush2.msra.mxu0 0.0
    %136 = vmatprep.subr.mxu0 0.0
    %137 = vmatpush2.msra.mxu0 0.0
    %138 = vmatprep.subr.mxu0 0.0
    %139 = vmatpush2.msra.mxu0 0.0
    %140 = vmatprep.mubr.f32.mxu0 0.0
    %141 = vmatmul.mubr.f32.gmra.mxu0 %v71
    %v142 = vpop.f32.mrf.mxu0
    %v143 = vadd.f32 %v67, %v142
    %v144 = vpop.f32.mrf.mxu0
    %145 = vmatprep.mubr.f32.mxu0 0.0
    %146 = vmatmul.mubr.f32.gmra.mxu0 %v74
    %v147 = vpop.f32.mrf.mxu0
    %v148 = vadd.f32 %v67, %v147
    %v149 = vpop.f32.mrf.mxu0
    %150 = vdwg.mxu0
    %v151 = vtanh.pop %v143
    %v152 = vtanh.pop %v148
    %v153 = vld [vmem:[%s3] sm:$0x1]
    %v155 = vlaneseq
    %v156 = vshrl.u32 %v155, 7
    %v157 = vsub.s32 0, %v156
    %v158 = vrot.slane %v153, %v157
    %v160 = vmul.f32 %v151, %v158
    %v161 = vmul.f32 %v152, %v158
    %v162 = vsel %vm69, %v160, 0.0
    %163 = vadd.xlane.f32.xlu0 %v162
    %v164 = vpop.xlane.xlu0 %163
    %v165 = vsel %vm69, %v161, 0.0
    %166 = vadd.xlane.f32.xlu0 %v165
    %v167 = vpop.xlane.xlu0 %166
    %v168 = vrot.slane %v164, 4
    %v169 = vmax.f32 %v164, %v168
    %v170 = vrot.slane %v169, 2
    %v171 = vmax.f32 %v169, %v170
    %v172 = vrot.slane %v171, 1
    %v173 = vmax.f32 %v171, %v172
    %v174 = vrot.slane %v167, 4
    %v175 = vmax.f32 %v167, %v174
    %v176 = vrot.slane %v175, 2
    %v177 = vmax.f32 %v175, %v176
    %v178 = vrot.slane %v177, 1
    %v179 = vmax.f32 %v177, %v178
    %v180 = vsub.f32 %v164, %v173
    %v181 = vsub.f32 %v167, %v179
    %v182 = vmul.f32 %v180, 1.442695
    %v183 = vpow.pop %v182
    %v184 = vmul.f32 %v181, 1.442695
    %v185 = vpow.pop %v184
    %v186 = vmul.f32 %v183, %v46
    %v187 = vmul.f32 %v185, %v47
    %v188 = vsel %vm69, %v186, 0.0
    %v189 = vrot.slane %v188, 4
    %v190 = vadd.f32 %v188, %v189
    %v191 = vrot.slane %v190, 2
    %v192 = vadd.f32 %v190, %v191
    %v193 = vrot.slane %v192, 1
    %v194 = vadd.f32 %v192, %v193
    %v195 = vsel %vm69, %v187, 0.0
    %v196 = vrot.slane %v195, 4
    %v197 = vadd.f32 %v195, %v196
    %v198 = vrot.slane %v197, 2
    %v199 = vadd.f32 %v197, %v198
    %v200 = vrot.slane %v199, 1
    %v201 = vadd.f32 %v199, %v200
    %v202 = vrot.slane %v183, 4
    %v203 = vadd.f32 %v183, %v202
    %v204 = vrot.slane %v203, 2
    %v205 = vadd.f32 %v203, %v204
    %v206 = vrot.slane %v205, 1
    %v207 = vadd.f32 %v205, %v206
    %v208 = vrot.slane %v185, 4
    %v209 = vadd.f32 %v185, %v208
    %v210 = vrot.slane %v209, 2
    %v211 = vadd.f32 %v209, %v210
    %v212 = vrot.slane %v211, 1
    %v213 = vadd.f32 %v211, %v212
    %v214 = vrcp.pop %v207
    %v215 = vmul.f32 %v194, %v214
    %v216 = vrcp.pop %v213
    %v217 = vmul.f32 %v201, %v216
    %vm220 = vcmask 1041409
    %v221 = vsel %vm220, %v217, %v215
    %vm223 = vcmask 254976
    %224 = vst.msk [vmem:[#allocation7] sm:$0x3] %vm223, %v221
    // Predicated region
    $region26: #{tpu_custom_call.1} parent=1 // pred_check
      _
    $region27: #{tpu_custom_call.1} parent=1 // pred_check_branch
      %226 = sbr.rel (0) target = $region29
    $region28: #{tpu_custom_call.1} parent=1 // pred_region
      %s228 = ssub.s32 32, 32
      %229 = vsyncadd [#allocation4], %s228
      %s231 = sshll.u32 [#allocation7], 4
      %s232 = int_to_ptr.vmem [resolvable:$true] %s231
      %234 = dma.vmem_to_hbm [thread:$0]  %s232, 32, %s4, [#allocation4]
    $region29: #{tpu_custom_call.1} parent=1 // pred_fallthru
      _
    // Predicated region
    $region30: #{tpu_custom_call.1} parent=1 // pred_check
      _
    $region31: #{tpu_custom_call.1} parent=1 // pred_check_branch
      %236 = sbr.rel (0) target = $region33
    $region32: #{tpu_custom_call.1} parent=1 // pred_region
      %237 = dma.done [#allocation4], 32
    $region33: #{tpu_custom_call.1} parent=1 // pred_fallthru
      _
    %238 = vsyncpa [#allocation3], 1
    %239 = vsyncpa [#allocation6], 1
    %240 = vsyncpa [#allocation4], 1

</llo_original>
